<compile_context>
chip_gen: v7x
topology: tpu7x:2x2x1
jax: 0.10.0
libtpu: 0.0.40
codegen_flags: <defaults>
</compile_context>

<pallas_src>
import math

import jax
import jax.numpy as jnp
from jax.experimental import pallas as pl
from jax.experimental.pallas import tpu as pltpu


def _flash_attention_kernel(
    q_ref, k_ref, v_ref, wo_ref, bo_ref,      # inputs
    o_ref,                                    # output
    m_scratch, l_scratch, acc_scratch,        # VMEM scratch
):
    """One (batch, q-tile, kv-tile) grid step.

    q_ref:  (1, H, tq, dh)  pre-projected, pre-scaled queries (head-major)
    k_ref:  (1, H, tk, dh)  pre-projected keys
    v_ref:  (1, H, tk, dh)  pre-projected values
    wo_ref: (H*dh, D)       output projection weight (pre-transposed)
    bo_ref: (1, D)          output projection bias (f32)
    o_ref:  (1, tq, D)      output tile
    m/l_scratch: (H, tq, 1) f32 online-softmax running max / denominator
    acc_scratch: (H, tq, dh) f32 un-normalized output accumulator
    """
    ki = pl.program_id(2)
    nk = pl.num_programs(2)

    @pl.when(ki == 0)
    def _init():
        m_scratch[...] = jnp.full_like(m_scratch, -jnp.inf)
        l_scratch[...] = jnp.zeros_like(l_scratch)
        acc_scratch[...] = jnp.zeros_like(acc_scratch)

    q = q_ref[0]                       # (H, tq, dh)  compute dtype (bf16 by default)
    k = k_ref[0]                       # (H, tk, dh)
    v = v_ref[0]                       # (H, tk, dh)

    # All heads in one batched dot_general; softmax scale already folded into q.
    dots = jnp.einsum("hqd,hkd->hqk", q, k,
                      preferred_element_type=jnp.float32)        # (H, tq, tk) f32

    # Online softmax update.
    m_prev = m_scratch[...]
    m_new = jnp.maximum(m_prev, jnp.max(dots, axis=-1, keepdims=True))
    alpha = jnp.exp(m_prev - m_new)
    # Keep exp in f32; only move it to bf16 if a bundle dump shows the EUP slot
    # binding (v6e/v7x have a bf16 EUP, v5e does not).
    p = jnp.exp(dots - m_new)
    l_scratch[...] = alpha * l_scratch[...] + jnp.sum(p, axis=-1, keepdims=True)
    acc_scratch[...] = alpha * acc_scratch[...] + jnp.einsum(
        "hqk,hkd->hqd", p.astype(v.dtype), v,
        preferred_element_type=jnp.float32)
    m_scratch[...] = m_new

    @pl.when(ki == nk - 1)
    def _finalize():
        heads, tq, dh = acc_scratch.shape
        # 1/l applied exactly once per output tile, outside the KV loop.
        out = acc_scratch[...] * pl.reciprocal(l_scratch[...], approx=False)
        # b h n d -> b n (h d); runs once per query tile (amortized over KV steps).
        out = jnp.swapaxes(out, 0, 1).reshape(tq, heads * dh)
        y = jnp.dot(out.astype(wo_ref.dtype), wo_ref[...],
                    preferred_element_type=jnp.float32) + bo_ref[...]
        o_ref[0] = y.astype(o_ref.dtype)                          # (tq, D) lane-dense slab


def _pick_tile(n, target=256):
    """Largest tile <= target that divides n (full n if n <= target).

    Never falls back below 16 (minimum packed-bf16 sublane tile)."""
    if n <= target:
        return n
    for t in (target, 256, 128, 64, 32, 16):
        if t <= target and n % t == 0:
            return t
    return n


def attention_pallas(x, w_qkv, w_out, b_out, *, heads, dim_head,
                     tq=None, tk=None, compute_dtype=jnp.bfloat16,
                     vmem_limit_bytes=48 * 1024 * 1024):
    """Fused self-attention forward.

    x: (B, N, D); w_qkv: (D, 3*H*dh); w_out: (H*dh, D); b_out: (D,).
    """
    B, N, D = x.shape
    inner = heads * dim_head
    assert w_qkv.shape == (D, 3 * inner)
    assert w_out.shape == (inner, D)

    tq = _pick_tile(N) if tq is None else tq
    tk = _pick_tile(N) if tk is None else tk
    assert N % tq == 0 and N % tk == 0, "sequence length must be divisible by tiles"

    scale = dim_head ** (-0.5)
    cdt = compute_dtype

    # ---- Q/K/V projections hoisted OUT of the (qi, ki) grid (biggest win). ----
    # One XLA matmul per projection (compute-dtype operands, f32 accumulation),
    # emitted head-major (B, H, N, dh); softmax scale folded into q here so the
    # kernel never rescales per KV step.
    xc = x.astype(cdt)
    wq = w_qkv[:, 0 * inner:1 * inner].astype(cdt)
    wk = w_qkv[:, 1 * inner:2 * inner].astype(cdt)
    wv = w_qkv[:, 2 * inner:3 * inner].astype(cdt)

    def project(w, s=None):
        t = jnp.einsum("bnd,de->bne", xc, w, preferred_element_type=jnp.float32)
        if s is not None:
            t = t * s
        return (t.reshape(B, N, heads, dim_head)
                 .transpose(0, 2, 1, 3)            # (B, H, N, dh)
                 .astype(cdt))

    q = project(wq, scale)
    k = project(wk)
    v = project(wv)

    w_o = w_out.astype(cdt)
    b_o = b_out.reshape(1, D).astype(jnp.float32)

    # NOTE (v7x): keep B * (N // tq) >= 2 (ideally even) so both TensorCores
    # get work along the "parallel" axes.
    grid = (B, N // tq, N // tk)

    return pl.pallas_call(
        _flash_attention_kernel,
        out_shape=jax.ShapeDtypeStruct((B, N, D), x.dtype),
        grid_spec=pltpu.PrefetchScalarGridSpec(
            num_scalar_prefetch=0,
            grid=grid,
            in_specs=[
                pl.BlockSpec((1, heads, tq, dim_head),
                             lambda b, qi, ki: (b, 0, qi, 0)),        # q tile
                pl.BlockSpec((1, heads, tk, dim_head),
                             lambda b, qi, ki: (b, 0, ki, 0)),        # k tile
                pl.BlockSpec((1, heads, tk, dim_head),
                             lambda b, qi, ki: (b, 0, ki, 0)),        # v tile
                pl.BlockSpec((inner, D), lambda b, qi, ki: (0, 0)),   # Wo (invariant)
                pl.BlockSpec((1, D), lambda b, qi, ki: (0, 0)),       # bo (invariant)
            ],
            out_specs=pl.BlockSpec((1, tq, D), lambda b, qi, ki: (b, qi, 0)),
            scratch_shapes=[
                pltpu.VMEM((heads, tq, 1), jnp.float32),              # running max
                pltpu.VMEM((heads, tq, 1), jnp.float32),              # running denom
                pltpu.VMEM((heads, tq, dim_head), jnp.float32),       # accumulator
            ],
        ),
        compiler_params=pltpu.CompilerParams(
            dimension_semantics=("parallel", "parallel", "arbitrary"),
            vmem_limit_bytes=vmem_limit_bytes,
        ),
    )(q, k, v, w_o, b_o)


def attention_reference(x, w_qkv, w_out, b_out, *, heads, dim_head):
    """Pure-JAX reference replicating the PyTorch forward (HIGHEST precision)."""
    B, N, D = x.shape
    inner = heads * dim_head
    scale = dim_head ** (-0.5)
    hp = jax.lax.Precision.HIGHEST
    qkv = jnp.matmul(x, w_qkv, precision=hp)                   # (B, N, 3*inner)
    q, k, v = jnp.split(qkv, 3, axis=-1)

    def to_heads(t):
        return t.reshape(B, N, heads, dim_head).transpose(0, 2, 1, 3)  # b h n d

    q, k, v = map(to_heads, (q, k, v))
    dots = jnp.einsum("bhqd,bhkd->bhqk", q, k, precision=hp) * scale
    attn = jax.nn.softmax(dots, axis=-1)
    out = jnp.einsum("bhqk,bhkd->bhqd", attn, v, precision=hp)
    out = out.transpose(0, 2, 1, 3).reshape(B, N, inner)       # b n (h d)
    return jnp.matmul(out, w_out, precision=hp) + b_out


def _make_params(key, dim, heads, dim_head):
    inner = heads * dim_head
    k_qkv, k_o, k_b = jax.random.split(key, 3)
    # PyTorch Linear stores (out, in); we keep the pre-transposed (in, out)
    # form so the kernel computes x @ W directly.
    bound_qkv = 1.0 / math.sqrt(dim)
    w_qkv = jax.random.uniform(k_qkv, (dim, 3 * inner), jnp.float32,
                               minval=-bound_qkv, maxval=bound_qkv)
    bound_o = 1.0 / math.sqrt(inner)
    w_out = jax.random.uniform(k_o, (inner, dim), jnp.float32,
                               minval=-bound_o, maxval=bound_o)
    b_out = jax.random.uniform(k_b, (dim,), jnp.float32,
                               minval=-bound_o, maxval=bound_o)
    return w_qkv, w_out, b_out


if __name__ == "__main__":
    root = jax.random.PRNGKey(0)

    # --- Test 1: small shapes, f32 compute path (single-tile, tight tolerance) ---
    B, N, dim = 2, 8, 32
    heads, dim_head = 2, 16
    k_x, k_p = jax.random.split(root, 2)
    x = jax.random.normal(k_x, (B, N, dim), dtype=jnp.float32)
    w_qkv, w_out, b_out = _make_params(k_p, dim, heads, dim_head)

    y = attention_pallas(x, w_qkv, w_out, b_out, heads=heads, dim_head=dim_head,
                         compute_dtype=jnp.float32)
    y = jax.block_until_ready(y)
    y_ref = attention_reference(x, w_qkv, w_out, b_out, heads=heads, dim_head=dim_head)
    assert jnp.allclose(y, y_ref, atol=2e-3, rtol=2e-3), "mismatch vs reference (small)"

    # --- Test 2: tiled / online-softmax path, default bf16 MXU operands ---
    # grid = (2, 2, 2): exercises init/accumulate/finalize and megacore sharding.
    B2, N2, dim2 = 2, 256, 128
    heads2, dim_head2 = 4, 32
    k_x2, k_p2 = jax.random.split(jax.random.fold_in(root, 1), 2)
    x2 = jax.random.normal(k_x2, (B2, N2, dim2), dtype=jnp.float32)
    w_qkv2, w_out2, b_out2 = _make_params(k_p2, dim2, heads2, dim_head2)

    y2 = attention_pallas(x2, w_qkv2, w_out2, b_out2,
                          heads=heads2, dim_head=dim_head2, tq=128, tk=128)
    y2 = jax.block_until_ready(y2)
    y2_ref = attention_reference(x2, w_qkv2, w_out2, b_out2,
                                 heads=heads2, dim_head=dim_head2)
    # bf16-operand tolerance (f32 accumulation).
    assert jnp.allclose(y2, y2_ref, atol=2e-2, rtol=2e-2), "mismatch vs reference (tiled)"

    # TODO(synk): selfatt=False (cross-attention, z input) branch and dropout p>0
    # (train-mode RNG) are not implemented; the module defaults (selfatt=True,
    # dropout=0) are fully covered.
    print("KERNEL_OK")
</pallas_src>

<mosaic_0001>
module attributes {stable_mosaic.version = 11 : i64} {
  func.func @_flash_attention_kernel(%arg0: i32, %arg1: i32, %arg2: i32, %arg3: memref<1x2x8x16xf32, #tpu.memory_space<vmem>>, %arg4: memref<1x2x8x16xf32, #tpu.memory_space<vmem>>, %arg5: memref<1x2x8x16xf32, #tpu.memory_space<vmem>>, %arg6: memref<32x32xf32, #tpu.memory_space<vmem>>, %arg7: memref<1x32xf32, #tpu.memory_space<vmem>>, %arg8: memref<1x8x32xf32, #tpu.memory_space<vmem>>, %arg9: memref<2x8x1xf32, #tpu.memory_space<vmem>>, %arg10: memref<2x8x1xf32, #tpu.memory_space<vmem>>, %arg11: memref<2x8x16xf32, #tpu.memory_space<vmem>>) attributes {dimension_semantics = [#tpu.dimension_semantics<parallel>, #tpu.dimension_semantics<parallel>, #tpu.dimension_semantics<arbitrary>], iteration_bounds = array<i64: 2, 1, 1>, scalar_prefetch = 0 : i64, scratch_operands = 3 : i64, tpu.core_type = #tpu.core_type<tc>, window_params = [{transform_indices = @transform_0, window_bounds = array<i64: 1, 2, 8, 16>}, {transform_indices = @transform_1, window_bounds = array<i64: 1, 2, 8, 16>}, {transform_indices = @transform_2, window_bounds = array<i64: 1, 2, 8, 16>}, {pipeline_mode = #tpu.pipeline_mode<synchronous>, transform_indices = @transform_3, window_bounds = array<i64: 32, 32>}, {pipeline_mode = #tpu.pipeline_mode<synchronous>, transform_indices = @transform_4, window_bounds = array<i64: 1, 32>}, {transform_indices = @transform_5, window_bounds = array<i64: 1, 8, 32>}]} {
    %c0_i32 = arith.constant 0 : i32
    %0 = arith.cmpi eq, %arg2, %c0_i32 : i32
    %1 = arith.extui %0 : i1 to i32
    %c0_i32_0 = arith.constant 0 : i32
    %2 = arith.cmpi ne, %1, %c0_i32_0 : i32
    scf.if %2 {
      %cst_35 = arith.constant 0xFF800000 : f32
      %35 = vector.broadcast %cst_35 : f32 to vector<2x8x1xf32>
      %c0_36 = arith.constant 0 : index
      %c0_37 = arith.constant 0 : index
      %c0_38 = arith.constant 0 : index
      %36 = vector.load %arg9[%c0_36, %c0_37, %c0_38] : memref<2x8x1xf32, #tpu.memory_space<vmem>>, vector<2x8x1xf32>
      tpu.vector_store %arg9[%c0_36, %c0_37, %c0_38], %35 {strides = array<i32>} : memref<2x8x1xf32, #tpu.memory_space<vmem>>, vector<2x8x1xf32>,
      %cst_39 = arith.constant 0.000000e+00 : f32
      %37 = vector.broadcast %cst_39 : f32 to vector<2x8x1xf32>
      %c0_40 = arith.constant 0 : index
      %c0_41 = arith.constant 0 : index
      %c0_42 = arith.constant 0 : index
      %38 = vector.load %arg10[%c0_40, %c0_41, %c0_42] : memref<2x8x1xf32, #tpu.memory_space<vmem>>, vector<2x8x1xf32>
      tpu.vector_store %arg10[%c0_40, %c0_41, %c0_42], %37 {strides = array<i32>} : memref<2x8x1xf32, #tpu.memory_space<vmem>>, vector<2x8x1xf32>,
      %cst_43 = arith.constant 0.000000e+00 : f32
      %39 = vector.broadcast %cst_43 : f32 to vector<2x8x16xf32>
      %c0_44 = arith.constant 0 : index
      %c0_45 = arith.constant 0 : index
      %c0_46 = arith.constant 0 : index
      %40 = vector.load %arg11[%c0_44, %c0_45, %c0_46] : memref<2x8x16xf32, #tpu.memory_space<vmem>>, vector<2x8x16xf32>
      tpu.vector_store %arg11[%c0_44, %c0_45, %c0_46], %39 {strides = array<i32>} : memref<2x8x16xf32, #tpu.memory_space<vmem>>, vector<2x8x16xf32>,
    } else {
    }
    %c0 = arith.constant 0 : index
    %c0_1 = arith.constant 0 : index
    %c0_2 = arith.constant 0 : index
    %c0_3 = arith.constant 0 : index
    %3 = vector.load %arg3[%c0, %c0_1, %c0_2, %c0_3] : memref<1x2x8x16xf32, #tpu.memory_space<vmem>>, vector<1x2x8x16xf32>
    %4 = vector.shape_cast %3 : vector<1x2x8x16xf32> to vector<2x8x16xf32>
    %c0_4 = arith.constant 0 : index
    %c0_5 = arith.constant 0 : index
    %c0_6 = arith.constant 0 : index
    %c0_7 = arith.constant 0 : index
    %5 = vector.load %arg4[%c0_4, %c0_5, %c0_6, %c0_7] : memref<1x2x8x16xf32, #tpu.memory_space<vmem>>, vector<1x2x8x16xf32>
    %6 = vector.shape_cast %5 : vector<1x2x8x16xf32> to vector<2x8x16xf32>
    %c0_8 = arith.constant 0 : index
    %c0_9 = arith.constant 0 : index
    %c0_10 = arith.constant 0 : index
    %c0_11 = arith.constant 0 : index
    %7 = vector.load %arg5[%c0_8, %c0_9, %c0_10, %c0_11] : memref<1x2x8x16xf32, #tpu.memory_space<vmem>>, vector<1x2x8x16xf32>
    %8 = vector.shape_cast %7 : vector<1x2x8x16xf32> to vector<2x8x16xf32>
    "tpu.trace_start"() <{level = 10 : i32, message = "hqd,hkd->hqk"}> : () -> ()
    %cst = arith.constant dense<0.000000e+00> : vector<2x8x8xf32>
    %9 = tpu.matmul %4, %6, %cst {dimension_numbers = #tpu.dot_dimension_numbers<[2], [2], [1], [1], [0, 0, 0, 1, 1, 1], [0], [0]>} : vector<2x8x16xf32>, vector<2x8x16xf32>, vector<2x8x8xf32> -> vector<2x8x8xf32>
    "tpu.trace_stop"() : () -> ()
    %c0_12 = arith.constant 0 : index
    %c0_13 = arith.constant 0 : index
    %c0_14 = arith.constant 0 : index
    %10 = vector.load %arg9[%c0_12, %c0_13, %c0_14] : memref<2x8x1xf32, #tpu.memory_space<vmem>>, vector<2x8x1xf32>
    %cst_15 = arith.constant dense<0xFF800000> : vector<2x8xf32>
    %11 = vector.multi_reduction <maximumf>, %9, %cst_15 [2] : vector<2x8x8xf32> to vector<2x8xf32>
    %12 = vector.shape_cast %11 : vector<2x8xf32> to vector<2x8x1xf32>
    %13 = arith.maximumf %10, %12 : vector<2x8x1xf32>
    %14 = arith.subf %10, %13 : vector<2x8x1xf32>
    %15 = math.exp %14 : vector<2x8x1xf32>
    %16 = vector.broadcast %13 : vector<2x8x1xf32> to vector<2x8x8xf32>
    %17 = arith.subf %9, %16 : vector<2x8x8xf32>
    %18 = math.exp %17 : vector<2x8x8xf32>
    %c0_16 = arith.constant 0 : index
    %c0_17 = arith.constant 0 : index
    %c0_18 = arith.constant 0 : index
    %19 = vector.load %arg10[%c0_16, %c0_17, %c0_18] : memref<2x8x1xf32, #tpu.memory_space<vmem>>, vector<2x8x1xf32>
    %20 = arith.mulf %15, %19 : vector<2x8x1xf32>
    %cst_19 = arith.constant dense<0.000000e+00> : vector<2x8xf32>
    %21 = vector.multi_reduction <add>, %18, %cst_19 [2] : vector<2x8x8xf32> to vector<2x8xf32>
    %22 = vector.shape_cast %21 : vector<2x8xf32> to vector<2x8x1xf32>
    %23 = arith.addf %20, %22 : vector<2x8x1xf32>
    %c0_20 = arith.constant 0 : index
    %c0_21 = arith.constant 0 : index
    %c0_22 = arith.constant 0 : index
    %24 = vector.load %arg10[%c0_20, %c0_21, %c0_22] : memref<2x8x1xf32, #tpu.memory_space<vmem>>, vector<2x8x1xf32>
    tpu.vector_store %arg10[%c0_20, %c0_21, %c0_22], %23 {strides = array<i32>} : memref<2x8x1xf32, #tpu.memory_space<vmem>>, vector<2x8x1xf32>,
    %c0_23 = arith.constant 0 : index
    %c0_24 = arith.constant 0 : index
    %c0_25 = arith.constant 0 : index
    %25 = vector.load %arg11[%c0_23, %c0_24, %c0_25] : memref<2x8x16xf32, #tpu.memory_space<vmem>>, vector<2x8x16xf32>
    %26 = vector.broadcast %15 : vector<2x8x1xf32> to vector<2x8x16xf32>
    %27 = arith.mulf %26, %25 : vector<2x8x16xf32>
    "tpu.trace_start"() <{level = 10 : i32, message = "hqk,hkd->hqd"}> : () -> ()
    %cst_26 = arith.constant dense<0.000000e+00> : vector<2x8x16xf32>
    %28 = tpu.matmul %18, %8, %cst_26 {dimension_numbers = #tpu.dot_dimension_numbers<[2], [1], [1], [2], [0, 0, 0, 1, 1, 2], [0], [0]>} : vector<2x8x8xf32>, vector<2x8x16xf32>, vector<2x8x16xf32> -> vector<2x8x16xf32>
    "tpu.trace_stop"() : () -> ()
    %29 = arith.addf %27, %28 : vector<2x8x16xf32>
    %c0_27 = arith.constant 0 : index
    %c0_28 = arith.constant 0 : index
    %c0_29 = arith.constant 0 : index
    %30 = vector.load %arg11[%c0_27, %c0_28, %c0_29] : memref<2x8x16xf32, #tpu.memory_space<vmem>>, vector<2x8x16xf32>
    tpu.vector_store %arg11[%c0_27, %c0_28, %c0_29], %29 {strides = array<i32>} : memref<2x8x16xf32, #tpu.memory_space<vmem>>, vector<2x8x16xf32>,
    %c0_30 = arith.constant 0 : index
    %c0_31 = arith.constant 0 : index
    %c0_32 = arith.constant 0 : index
    %31 = vector.load %arg9[%c0_30, %c0_31, %c0_32] : memref<2x8x1xf32, #tpu.memory_space<vmem>>, vector<2x8x1xf32>
    tpu.vector_store %arg9[%c0_30, %c0_31, %c0_32], %13 {strides = array<i32>} : memref<2x8x1xf32, #tpu.memory_space<vmem>>, vector<2x8x1xf32>,
    %c0_i32_33 = arith.constant 0 : i32
    %32 = arith.cmpi eq, %arg2, %c0_i32_33 : i32
    %33 = arith.extui %32 : i1 to i32
    %c0_i32_34 = arith.constant 0 : i32
    %34 = arith.cmpi ne, %33, %c0_i32_34 : i32
    scf.if %34 {
      %c0_35 = arith.constant 0 : index
      %c0_36 = arith.constant 0 : index
      %c0_37 = arith.constant 0 : index
      %35 = vector.load %arg11[%c0_35, %c0_36, %c0_37] : memref<2x8x16xf32, #tpu.memory_space<vmem>>, vector<2x8x16xf32>
      %c0_38 = arith.constant 0 : index
      %c0_39 = arith.constant 0 : index
      %c0_40 = arith.constant 0 : index
      %36 = vector.load %arg10[%c0_38, %c0_39, %c0_40] : memref<2x8x1xf32, #tpu.memory_space<vmem>>, vector<2x8x1xf32>
      %37 = tpu.reciprocal %36 : vector<2x8x1xf32> -> vector<2x8x1xf32>
      %38 = vector.broadcast %37 : vector<2x8x1xf32> to vector<2x8x16xf32>
      %39 = arith.mulf %35, %38 : vector<2x8x16xf32>
      %40 = tpu.transpose %39, [1, 0, 2] : vector<2x8x16xf32> -> vector<8x2x16xf32>
      %41 = vector.shape_cast %40 : vector<8x2x16xf32> to vector<8x32xf32>
      %c0_41 = arith.constant 0 : index
      %c0_42 = arith.constant 0 : index
      %42 = vector.load %arg6[%c0_41, %c0_42] : memref<32x32xf32, #tpu.memory_space<vmem>>, vector<32x32xf32>
      %cst_43 = arith.constant dense<0.000000e+00> : vector<8x32xf32>
      %43 = tpu.matmul %41, %42, %cst_43 {dimension_numbers = #tpu.dot_dimension_numbers<[1], [0], [0], [1], [0, 0, 1, 1], [], []>} : vector<8x32xf32>, vector<32x32xf32>, vector<8x32xf32> -> vector<8x32xf32>
      %c0_44 = arith.constant 0 : index
      %c0_45 = arith.constant 0 : index
      %44 = vector.load %arg7[%c0_44, %c0_45] : memref<1x32xf32, #tpu.memory_space<vmem>>, vector<1x32xf32>
      %45 = vector.broadcast %44 : vector<1x32xf32> to vector<8x32xf32>
      %46 = arith.addf %43, %45 : vector<8x32xf32>
      %c0_46 = arith.constant 0 : index
      %c0_47 = arith.constant 0 : index
      %c0_48 = arith.constant 0 : index
      %47 = vector.load %arg8[%c0_46, %c0_47, %c0_48] : memref<1x8x32xf32, #tpu.memory_space<vmem>>, vector<1x8x32xf32>
      %48 = vector.shape_cast %47 : vector<1x8x32xf32> to vector<8x32xf32>
      %49 = vector.shape_cast %46 : vector<8x32xf32> to vector<1x8x32xf32>
      tpu.vector_store %arg8[%c0_46, %c0_47, %c0_48], %49 {strides = array<i32>} : memref<1x8x32xf32, #tpu.memory_space<vmem>>, vector<1x8x32xf32>,
    } else {
    }
    return
  }
  func.func @transform_0(%arg0: i32, %arg1: i32, %arg2: i32) -> (i32, i32, i32, i32) {
    %c0_i32 = arith.constant 0 : i32
    %c0_i32_0 = arith.constant 0 : i32
    %c0_i32_1 = arith.constant 0 : i32
    return %arg0, %c0_i32, %arg1, %c0_i32_0 : i32, i32, i32, i32
  }
  func.func @transform_1(%arg0: i32, %arg1: i32, %arg2: i32) -> (i32, i32, i32, i32) {
    %c0_i32 = arith.constant 0 : i32
    %c0_i32_0 = arith.constant 0 : i32
    %c0_i32_1 = arith.constant 0 : i32
    return %arg0, %c0_i32, %arg2, %c0_i32_0 : i32, i32, i32, i32
  }
  func.func @transform_2(%arg0: i32, %arg1: i32, %arg2: i32) -> (i32, i32, i32, i32) {
    %c0_i32 = arith.constant 0 : i32
    %c0_i32_0 = arith.constant 0 : i32
    %c0_i32_1 = arith.constant 0 : i32
    return %arg0, %c0_i32, %arg2, %c0_i32_0 : i32, i32, i32, i32
  }
  func.func @transform_3(%arg0: i32, %arg1: i32, %arg2: i32) -> (i32, i32) {
    %c0_i32 = arith.constant 0 : i32
    %c0_i32_0 = arith.constant 0 : i32
    %c0_i32_1 = arith.constant 0 : i32
    return %c0_i32, %c0_i32_0 : i32, i32
  }
  func.func @transform_4(%arg0: i32, %arg1: i32, %arg2: i32) -> (i32, i32) {
    %c0_i32 = arith.constant 0 : i32
    %c0_i32_0 = arith.constant 0 : i32
    %c0_i32_1 = arith.constant 0 : i32
    return %c0_i32, %c0_i32_0 : i32, i32
  }
  func.func @transform_5(%arg0: i32, %arg1: i32, %arg2: i32) -> (i32, i32, i32) {
    %c0_i32 = arith.constant 0 : i32
    %c0_i32_0 = arith.constant 0 : i32
    return %arg0, %arg1, %c0_i32 : i32, i32, i32
  }
}

</mosaic_0001>

<llo_original>
// kernel: tpu_custom_call.1
$region0: #{tpu_custom_call.1}
  #allocation0 [shape = 'u32[]', space=smem, size = 0x4, offset = 0x4, fixed_abs, tag = 'smem constant byte address 0x4 - core index']
  #allocation1 [shape = 'u32[144,128]{1,0:T(1,128)}', space=vmem, size = 0x12000, scoped, tag = 'internal scratch']
  #allocation2 [shape = 'f32[2,8,1]{2,1,0:T(8,128)}', space=vmem, size = 0x2000, scoped, tag = 'scratch operand']
  #allocation3 [shape = 'f32[2,8,1]{2,1,0:T(8,128)}', space=vmem, size = 0x2000, scoped, tag = 'scratch operand']
  #allocation4 [shape = 'f32[2,8,16]{2,1,0:T(8,128)}', space=vmem, size = 0x2000, scoped, tag = 'scratch operand']
  %s0 = inlined_call_operand.hbm [shape: f32[2,2,8,16], index: 0, kind: input, shape index: {}]
  %s1 = inlined_call_operand.hbm [shape: f32[2,2,8,16], index: 1, kind: input, shape index: {}]
  %s2 = inlined_call_operand.hbm [shape: f32[2,2,8,16], index: 2, kind: input, shape index: {}]
  %s3 = inlined_call_operand.hbm [shape: f32[32,32], index: 3, kind: input, shape index: {}]
  %s4 = inlined_call_operand.vmem [shape: f32[1,32], index: 4, kind: input, shape index: {}]
  %s5 = inlined_call_operand.hbm [shape: f32[2,8,32], index: 5, kind: output, shape index: {}]
  %s6 = sld [smem:[#allocation0]]
  $region77: #{tpu_custom_call.1} parent=0
    _
  %s8 = ssub.s32 1, %s6
  %s9 = scalar_select 0, %s8, %s6
  $region1: #{tpu_custom_call.1} parent=0
    #allocation5 [shape = 'u8[16384]{0}', space=vmem, size = 0x4000, scoped, tag = 'input window, operand 0']
    #allocation6 [shape = 's32[2]{0}', space=sflag, size = 0x8, scoped, tag = 'scoped memory for tpu_custom_call.1']
    #allocation7 [shape = 's32[2]{0}', space=sflag, size = 0x8, scoped, tag = 'scoped memory for tpu_custom_call.1']
    #allocation8 [shape = 'u8[16384]{0}', space=vmem, size = 0x4000, scoped, tag = 'input window, operand 1']
    #allocation9 [shape = 's32[2]{0}', space=sflag, size = 0x8, scoped, tag = 'scoped memory for tpu_custom_call.1']
    #allocation10 [shape = 'u8[16384]{0}', space=vmem, size = 0x4000, scoped, tag = 'input window, operand 2']
    #allocation11 [shape = 'u8[16384]{0}', space=vmem, size = 0x4000, scoped, tag = 'input window, operand 3, single buffered']
    #allocation12 [shape = 's32[1]{0}', space=sflag, size = 0x4, scoped, tag = 'scoped memory for tpu_custom_call.1']
    #allocation13 [shape = 'u8[8192]{0}', space=vmem, size = 0x2000, scoped, tag = 'output window, operand 0']
    %10 = vsyncpa [#allocation6], 0
    %s11 = scalar_lea.sflag [#allocation6], 1
    %12 = vsyncpa %s11, 0
    %13 = vsyncpa [#allocation9], 0
    %s14 = scalar_lea.sflag [#allocation9], 1
    %15 = vsyncpa %s14, 0
    %16 = vsyncpa [#allocation12], 0
    %17 = vsyncpa [#allocation7], 0
    %s18 = scalar_lea.sflag [#allocation7], 1
    %19 = vsyncpa %s18, 0
    loop: start=0, step=1, limit=4
    $region2: #{tpu_custom_call.1} parent=1 // loop_pre_header
      _
    $region3: #{tpu_custom_call.1} parent=1 // loop_header
      %s21 = sphi 0, %s25
      %p22 = scmp.ge.s32.totalorder %s21, 4
      %s28 = sphi 0, %s47
      %s29 = sphi 0, %s43
      %s30 = sphi 0, %s39
      %s31 = sphi 0, %s28
      %s32 = sphi 0, %s29
      %s33 = sphi 0, %s30
      %s34 = sphi 0, %s31
      %s35 = sphi 0, %s32
      %s36 = sphi 0, %s33
      %s52 = sphi 0, %s54
      %s55 = sphi 0, %s52
      %s56 = sphi 0, %s55
      %s72 = sphi 0, %s56
      %s80 = sphi 0, %s82
      %s83 = sphi 0, %s80
      %s84 = sphi 0, %s83
      %s100 = sphi 0, %s84
      %s108 = sphi 0, %s110
      %s111 = sphi 0, %s108
      %s112 = sphi 0, %s111
      %s128 = sphi 0, %s112
      %s132 = sphi 0, %s132
      %s134 = sphi 0, %s132
      %s135 = sphi 0, %s134
      %s149 = sphi 0, %s135
      %s153 = sphi 0, %s153
      %s155 = sphi 0, %s153
      %s156 = sphi 0, %s155
      %s170 = sphi 0, %s156
      %s178 = sphi 0, %s180
      %s181 = sphi 0, %s178
      %s182 = sphi 0, %s181
      %s198 = sphi 0, %s182
    $region4: #{tpu_custom_call.1} parent=1 // loop_header_branch
      %24 = sbr.rel (%p22) target = $region8
    $region5: #{tpu_custom_call.1} parent=1 // loop_body
      %s26 = ssub.s32 %s21, 1
      %s27 = ssub.s32 %s21, 2
      %s37 = sadd.s32 1, %s30
      %p38 = scmp.ge.s32.totalorder %s37, 1
      %s39 = scalar_select %p38, 0, %s37
      %s40 = sadd.s32 1, %s29
      %s41 = scalar_select %p38, %s40, %s29
      %p42 = scmp.ge.s32.totalorder %s41, 1
      %s43 = scalar_select %p42, 0, %s41
      %s44 = sadd.s32 1, %s28
      %s45 = scalar_select %p42, %s44, %s28
      %p46 = scmp.ge.s32.totalorder %s45, 2
      %s47 = scalar_select %p46, 0, %s45
      %s48 = ssub.s32 %s28, %s47
      %s49 = ssub.s32 %s29, %s43
      %s50 = sor.u32 %s48, %s49
      %p51 = scmp.eq.s32.totalorder %s50, 0
      %s53 = sadd.s32 %s52, 1
      %s54 = scalar_select %p51, %s52, %s53
      %p57 = pneg %p51
      %p58 = scmp.eq.s32.totalorder %s21, 1
      %p59 = por %p57, %p58
      %p60 = scmp.ne.s32.totalorder %s52, %s55
      %p61 = scmp.eq.s32.totalorder %s21, 0
      %p62 = por %p60, %p61
      %p63 = scmp.ne.s32.totalorder %s52, %s55
      %p64 = scmp.eq.s32.totalorder %s26, 1
      %p65 = por %p63, %p64
      %p66 = scmp.ne.s32.totalorder %s55, %s56
      %p67 = scmp.eq.s32.totalorder %s26, 0
      %p68 = por %p66, %p67
      %p69 = scmp.ne.s32.totalorder %s55, %s56
      %p70 = scmp.eq.s32.totalorder %s27, 1
      %p71 = por %p69, %p70
      %p73 = scmp.ne.s32.totalorder %s56, %s72
      %p74 = scmp.eq.s32.totalorder %s27, 0
      %p75 = por %p73, %p74
      %s76 = ssub.s32 %s28, %s47
      %s77 = ssub.s32 %s30, %s39
      %s78 = sor.u32 %s76, %s77
      %p79 = scmp.eq.s32.totalorder %s78, 0
      %s81 = sadd.s32 %s80, 1
      %s82 = scalar_select %p79, %s80, %s81
      %p85 = pneg %p79
      %p86 = scmp.eq.s32.totalorder %s21, 1
      %p87 = por %p85, %p86
      %p88 = scmp.ne.s32.totalorder %s80, %s83
      %p89 = scmp.eq.s32.totalorder %s21, 0
      %p90 = por %p88, %p89
      %p91 = scmp.ne.s32.totalorder %s80, %s83
      %p92 = scmp.eq.s32.totalorder %s26, 1
      %p93 = por %p91, %p92
      %p94 = scmp.ne.s32.totalorder %s83, %s84
      %p95 = scmp.eq.s32.totalorder %s26, 0
      %p96 = por %p94, %p95
      %p97 = scmp.ne.s32.totalorder %s83, %s84
      %p98 = scmp.eq.s32.totalorder %s27, 1
      %p99 = por %p97, %p98
      %p101 = scmp.ne.s32.totalorder %s84, %s100
      %p102 = scmp.eq.s32.totalorder %s27, 0
      %p103 = por %p101, %p102
      %s104 = ssub.s32 %s28, %s47
      %s105 = ssub.s32 %s30, %s39
      %s106 = sor.u32 %s104, %s105
      %p107 = scmp.eq.s32.totalorder %s106, 0
      %s109 = sadd.s32 %s108, 1
      %s110 = scalar_select %p107, %s108, %s109
      %p113 = pneg %p107
      %p114 = scmp.eq.s32.totalorder %s21, 1
      %p115 = por %p113, %p114
      %p116 = scmp.ne.s32.totalorder %s108, %s111
      %p117 = scmp.eq.s32.totalorder %s21, 0
      %p118 = por %p116, %p117
      %p119 = scmp.ne.s32.totalorder %s108, %s111
      %p120 = scmp.eq.s32.totalorder %s26, 1
      %p121 = por %p119, %p120
      %p122 = scmp.ne.s32.totalorder %s111, %s112
      %p123 = scmp.eq.s32.totalorder %s26, 0
      %p124 = por %p122, %p123
      %p125 = scmp.ne.s32.totalorder %s111, %s112
      %p126 = scmp.eq.s32.totalorder %s27, 1
      %p127 = por %p125, %p126
      %p129 = scmp.ne.s32.totalorder %s112, %s128
      %p130 = scmp.eq.s32.totalorder %s27, 0
      %p131 = por %p129, %p130
      %s133 = sadd.s32 %s132, 1
      %p136 = scmp.eq.s32.totalorder %s21, 1
      %p137 = scmp.ne.s32.totalorder %s132, %s134
      %p138 = scmp.eq.s32.totalorder %s21, 0
      %p139 = por %p137, %p138
      %p140 = scmp.ne.s32.totalorder %s132, %s134
      %p141 = scmp.eq.s32.totalorder %s26, 1
      %p142 = por %p140, %p141
      %p143 = scmp.ne.s32.totalorder %s134, %s135
      %p144 = scmp.eq.s32.totalorder %s26, 0
      %p145 = por %p143, %p144
      %p146 = scmp.ne.s32.totalorder %s134, %s135
      %p147 = scmp.eq.s32.totalorder %s27, 1
      %p148 = por %p146, %p147
      %p150 = scmp.ne.s32.totalorder %s135, %s149
      %p151 = scmp.eq.s32.totalorder %s27, 0
      %p152 = por %p150, %p151
      %s154 = sadd.s32 %s153, 1
      %p157 = scmp.eq.s32.totalorder %s21, 1
      %p158 = scmp.ne.s32.totalorder %s153, %s155
      %p159 = scmp.eq.s32.totalorder %s21, 0
      %p160 = por %p158, %p159
      %p161 = scmp.ne.s32.totalorder %s153, %s155
      %p162 = scmp.eq.s32.totalorder %s26, 1
      %p163 = por %p161, %p162
      %p164 = scmp.ne.s32.totalorder %s155, %s156
      %p165 = scmp.eq.s32.totalorder %s26, 0
      %p166 = por %p164, %p165
      %p167 = scmp.ne.s32.totalorder %s155, %s156
      %p168 = scmp.eq.s32.totalorder %s27, 1
      %p169 = por %p167, %p168
      %p171 = scmp.ne.s32.totalorder %s156, %s170
      %p172 = scmp.eq.s32.totalorder %s27, 0
      %p173 = por %p171, %p172
      %s174 = ssub.s32 %s28, %s47
      %s175 = ssub.s32 %s29, %s43
      %s176 = sor.u32 %s174, %s175
      %p177 = scmp.eq.s32.totalorder %s176, 0
      %s179 = sadd.s32 %s178, 1
      %s180 = scalar_select %p177, %s178, %s179
      %p183 = pneg %p177
      %p184 = scmp.eq.s32.totalorder %s21, 1
      %p185 = por %p183, %p184
      %p186 = scmp.ne.s32.totalorder %s178, %s181
      %p187 = scmp.eq.s32.totalorder %s21, 0
      %p188 = por %p186, %p187
      %p189 = scmp.ne.s32.totalorder %s178, %s181
      %p190 = scmp.eq.s32.totalorder %s26, 1
      %p191 = por %p189, %p190
      %p192 = scmp.ne.s32.totalorder %s181, %s182
      %p193 = scmp.eq.s32.totalorder %s26, 0
      %p194 = por %p192, %p193
      %p195 = scmp.ne.s32.totalorder %s181, %s182
      %p196 = scmp.eq.s32.totalorder %s27, 1
      %p197 = por %p195, %p196
      %p199 = scmp.ne.s32.totalorder %s182, %s198
      %p200 = scmp.eq.s32.totalorder %s27, 0
      %p201 = por %p199, %p200
      %p202 = scmp.le.s32.totalorder 1, %s21
      %p203 = scmp.lt.s32.totalorder %s21, 3
      %p204 = pnand %p202, %p203
      %p205 = pneg %p204
      // Predicated region
      $region9: #{tpu_custom_call.1} parent=5 // pred_check
        _
      $region10: #{tpu_custom_call.1} parent=5 // pred_check_branch
        %207 = sbr.rel (%p204) target = $region12
      $region11: #{tpu_custom_call.1} parent=5 // pred_region
        %s208 = ssub.s32 %s21, 1
        // Predicated region
        $region13: #{tpu_custom_call.1} parent=11 // pred_check
          %p209 = pneg %p145
        $region14: #{tpu_custom_call.1} parent=11 // pred_check_branch
          %211 = sbr.rel (%p209) target = $region16
        $region15: #{tpu_custom_call.1} parent=11 // pred_region
          %s213 = ssub.s32 512, 512
          %214 = vsyncadd [#allocation12], %s213
          %s215 = sshll.u32 [#allocation11], 4
          %s216 = int_to_ptr.vmem [resolvable:$true] %s215
          %221 = dma.hbm_to_vmem [thread:$0]  %s3, 512, %s216, [#allocation12], 128, 128, 8
        $region16: #{tpu_custom_call.1} parent=11 // pred_fallthru
          _
        // Predicated region
        $region17: #{tpu_custom_call.1} parent=11 // pred_check
          %p222 = pneg %p166
        $region18: #{tpu_custom_call.1} parent=11 // pred_check_branch
          %224 = sbr.rel (%p222) target = $region20
        $region19: #{tpu_custom_call.1} parent=11 // pred_region
          _
        $region20: #{tpu_custom_call.1} parent=11 // pred_fallthru
          _
      $region12: #{tpu_custom_call.1} parent=5 // pred_fallthru
        _
      %p225 = scmp.lt.s32.totalorder %s21, 2
      // Predicated region
      $region21: #{tpu_custom_call.1} parent=5 // pred_check
        %p226 = pneg %p225
      $region22: #{tpu_custom_call.1} parent=5 // pred_check_branch
        %228 = sbr.rel (%p226) target = $region24
      $region23: #{tpu_custom_call.1} parent=5 // pred_region
        // Predicated region
        $region25: #{tpu_custom_call.1} parent=23 // pred_check
          %p229 = pneg %p62
        $region26: #{tpu_custom_call.1} parent=23 // pred_check_branch
          %231 = sbr.rel (%p229) target = $region28
        $region27: #{tpu_custom_call.1} parent=23 // pred_region
          %s232 = sand.u32 %s52, 1
          %s233 = scalar_lea.sflag [#allocation6], %s232
          %s234 = sand.u32 %s52, 1
          %s235 = smul.addr %s234, 16
          %s236 = scalar_lea.vmem [#allocation5], %s235
          %s238 = ssub.s32 256, 256
          %239 = vsyncadd %s233, %s238
          %s240 = smul.addr %s28, 2
          %s241 = sadd.s32 %s29, %s240
          %s242 = smul.addr %s241, 128
          %s243 = scalar_lea.hbm %s0, %s242
          %s244 = sshll.u32 %s236, 4
          %s245 = int_to_ptr.vmem [resolvable:$true] %s244
          %250 = dma.hbm_to_vmem [thread:$0]  %s243, 256, %s245, %s233, 128, 128, 8
        $region28: #{tpu_custom_call.1} parent=23 // pred_fallthru
          _
        // Predicated region
        $region29: #{tpu_custom_call.1} parent=23 // pred_check
          %p251 = pneg %p90
        $region30: #{tpu_custom_call.1} parent=23 // pred_check_branch
          %253 = sbr.rel (%p251) target = $region32
        $region31: #{tpu_custom_call.1} parent=23 // pred_region
          %s254 = sand.u32 %s21, 1
          %s255 = scalar_lea.sflag [#allocation9], %s254
          %s256 = sand.u32 %s80, 1
          %s257 = smul.addr %s256, 16
          %s258 = scalar_lea.vmem [#allocation8], %s257
          %s260 = ssub.s32 256, 256
          %261 = vsyncadd %s255, %s260
          %s262 = smul.addr %s28, 2
          %s263 = sadd.s32 %s30, %s262
          %s264 = smul.addr %s263, 128
          %s265 = scalar_lea.hbm %s1, %s264
          %s266 = sshll.u32 %s258, 4
          %s267 = int_to_ptr.vmem [resolvable:$true] %s266
          %272 = dma.hbm_to_vmem [thread:$0]  %s265, 256, %s267, %s255, 128, 128, 8
        $region32: #{tpu_custom_call.1} parent=23 // pred_fallthru
          _
        // Predicated region
        $region33: #{tpu_custom_call.1} parent=23 // pred_check
          %p273 = pneg %p118
        $region34: #{tpu_custom_call.1} parent=23 // pred_check_branch
          %275 = sbr.rel (%p273) target = $region36
        $region35: #{tpu_custom_call.1} parent=23 // pred_region
          %s276 = sand.u32 %s21, 1
          %s277 = scalar_lea.sflag [#allocation9], %s276
          %s278 = sand.u32 %s108, 1
          %s279 = smul.addr %s278, 16
          %s280 = scalar_lea.vmem [#allocation10], %s279
          %s282 = ssub.s32 256, 256
          %283 = vsyncadd %s277, %s282
          %s284 = smul.addr %s28, 2
          %s285 = sadd.s32 %s30, %s284
          %s286 = smul.addr %s285, 128
          %s287 = scalar_lea.hbm %s2, %s286
          %s288 = sshll.u32 %s280, 4
          %s289 = int_to_ptr.vmem [resolvable:$true] %s288
          %294 = dma.hbm_to_vmem [thread:$0]  %s287, 256, %s289, %s277, 128, 128, 8
        $region36: #{tpu_custom_call.1} parent=23 // pred_fallthru
          _
      $region24: #{tpu_custom_call.1} parent=5 // pred_fallthru
        _
      %p295 = scmp.le.s32.totalorder 1, %s21
      %p296 = scmp.lt.s32.totalorder %s21, 3
      %p297 = pnand %p295, %p296
      %p298 = pneg %p297
      // Predicated region
      $region37: #{tpu_custom_call.1} parent=5 // pred_check
        _
      $region38: #{tpu_custom_call.1} parent=5 // pred_check_branch
        %300 = sbr.rel (%p297) target = $region40
      $region39: #{tpu_custom_call.1} parent=5 // pred_region
        %s301 = ssub.s32 %s21, 1
        %s302 = sand.u32 %s55, 1
        %s303 = scalar_lea.sflag [#allocation6], %s302
        %s304 = sand.u32 %s55, 1
        %s305 = smul.addr %s304, 16
        %s306 = scalar_lea.vmem [#allocation5], %s305
        // Predicated region
        $region41: #{tpu_custom_call.1} parent=39 // pred_check
          %p307 = pneg %p68
        $region42: #{tpu_custom_call.1} parent=39 // pred_check_branch
          %309 = sbr.rel (%p307) target = $region44
        $region43: #{tpu_custom_call.1} parent=39 // pred_region
          %310 = dma.done %s303, 256
        $region44: #{tpu_custom_call.1} parent=39 // pred_fallthru
          _
        %s311 = sand.u32 %s26, 1
        %s312 = scalar_lea.sflag [#allocation9], %s311
        %s313 = sand.u32 %s83, 1
        %s314 = smul.addr %s313, 16
        %s315 = scalar_lea.vmem [#allocation8], %s314
        // Predicated region
        $region45: #{tpu_custom_call.1} parent=39 // pred_check
          %p316 = pneg %p96
        $region46: #{tpu_custom_call.1} parent=39 // pred_check_branch
          %318 = sbr.rel (%p316) target = $region48
        $region47: #{tpu_custom_call.1} parent=39 // pred_region
          %319 = dma.done %s312, 256
        $region48: #{tpu_custom_call.1} parent=39 // pred_fallthru
          _
        %s320 = sand.u32 %s26, 1
        %s321 = scalar_lea.sflag [#allocation9], %s320
        %s322 = sand.u32 %s111, 1
        %s323 = smul.addr %s322, 16
        %s324 = scalar_lea.vmem [#allocation10], %s323
        // Predicated region
        $region49: #{tpu_custom_call.1} parent=39 // pred_check
          %p325 = pneg %p124
        $region50: #{tpu_custom_call.1} parent=39 // pred_check_branch
          %327 = sbr.rel (%p325) target = $region52
        $region51: #{tpu_custom_call.1} parent=39 // pred_region
          %328 = dma.done %s321, 256
        $region52: #{tpu_custom_call.1} parent=39 // pred_fallthru
          _
        // Predicated region
        $region53: #{tpu_custom_call.1} parent=39 // pred_check
          %p329 = pneg %p145
        $region54: #{tpu_custom_call.1} parent=39 // pred_check_branch
          %331 = sbr.rel (%p329) target = $region56
        $region55: #{tpu_custom_call.1} parent=39 // pred_region
          %332 = dma.done [#allocation12], 512
        $region56: #{tpu_custom_call.1} parent=39 // pred_fallthru
          _
        %s333 = sand.u32 %s55, 1
        %s334 = scalar_lea.sflag [#allocation6], %s333
        %s335 = sand.u32 %s55, 1
        %s336 = smul.addr %s335, 16
        %s337 = scalar_lea.vmem [#allocation5], %s336
        %p338 = pneg %p68
        %p339 = pneg %p65
        %s340 = sand.u32 %s26, 1
        %s341 = scalar_lea.sflag [#allocation9], %s340
        %s342 = sand.u32 %s83, 1
        %s343 = smul.addr %s342, 16
        %s344 = scalar_lea.vmem [#allocation8], %s343
        %p345 = pneg %p96
        %p346 = pneg %p93
        %s347 = sand.u32 %s26, 1
        %s348 = scalar_lea.sflag [#allocation9], %s347
        %s349 = sand.u32 %s111, 1
        %s350 = smul.addr %s349, 16
        %s351 = scalar_lea.vmem [#allocation10], %s350
        %p352 = pneg %p124
        %p353 = pneg %p121
        %p354 = pneg %p145
        %p355 = pneg %p142
        %p356 = pneg %p166
        %p357 = pneg %p163
        %p358 = pneg %p194
        %p359 = pneg %p191
        %s360 = sand.u32 %s181, 1
        %s361 = scalar_lea.sflag [#allocation7], %s360
        %s362 = sand.u32 %s181, 1
        %s363 = smul.addr %s362, 8
        %s364 = scalar_lea.vmem [#allocation13], %s363
        %p365 = scmp.eq.s32.totalorder %s33, 0
        // Predicated region
        $region57: #{tpu_custom_call.1} parent=39 // pred_check
          %p366 = pneg %p365
        $region58: #{tpu_custom_call.1} parent=39 // pred_check_branch
          %368 = sbr.rel (%p366) target = $region60
        $region59: #{tpu_custom_call.1} parent=39 // pred_region
          %vm369 = vcmask 7168
          %370 = vst.msk [vmem:[#allocation2] sm:$0xff] %vm369, -inf
          %371 = vst.msk [vmem:[#allocation2 + $0x8] sm:$0xff] %vm369, -inf
          %372 = vst.msk [vmem:[#allocation3] sm:$0xff] %vm369, 0.0
          %373 = vst.msk [vmem:[#allocation3 + $0x8] sm:$0xff] %vm369, 0.0
          %vm374 = vcmask 130048
          %375 = vst.msk [vmem:[#allocation4] sm:$0xff] %vm374, 0.0
          %376 = vst.msk [vmem:[#allocation4 + $0x8] sm:$0xff] %vm374, 0.0
        $region60: #{tpu_custom_call.1} parent=39 // pred_fallthru
          _
        %v377 = vld [vmem:[%s306] sm:$0xff]
        %v378 = vld [vmem:[%s306 + $0x8] sm:$0xff]
        %v379 = vld [vmem:[%s315] sm:$0xff]
        %v380 = vld [vmem:[%s315 + $0x8] sm:$0xff]
        %v381 = vld [vmem:[%s324] sm:$0xff]
        %v382 = vld [vmem:[%s324 + $0x8] sm:$0xff]
        %vm383 = vcmask 130048
        %v385 = vsel %vm383, %v377, 0
        %v388 = vsel %vm383, %v379, 0
        %390 = vmatprep.subr.mxu0 0.0
        %391 = vmatpush1.xpose.msra.mxu0 %v388
        %392 = vmatprep.subr.mxu0 0.0
        %393 = vmatpush1.xpose.msra.mxu0 0.0
        %394 = vmatprep.subr.mxu0 0.0
        %395 = vmatpush1.xpose.msra.mxu0 0.0
        %396 = vmatprep.subr.mxu0 0.0
        %397 = vmatpush1.xpose.msra.mxu0 0.0
        %398 = vmatprep.subr.mxu0 0.0
        %399 = vmatpush1.xpose.msra.mxu0 0.0
        %400 = vmatprep.subr.mxu0 0.0
        %401 = vmatpush1.xpose.msra.mxu0 0.0
        %402 = vmatprep.subr.mxu0 0.0
        %403 = vmatpush1.xpose.msra.mxu0 0.0
        %404 = vmatprep.subr.mxu0 0.0
        %405 = vmatpush1.xpose.msra.mxu0 0.0
        %406 = vmatprep.subr.mxu0 0.0
        %407 = vmatpush1.xpose.msra.mxu0 0.0
        %408 = vmatprep.subr.mxu0 0.0
        %409 = vmatpush1.xpose.msra.mxu0 0.0
        %410 = vmatprep.subr.mxu0 0.0
        %411 = vmatpush1.xpose.msra.mxu0 0.0
        %412 = vmatprep.subr.mxu0 0.0
        %413 = vmatpush1.xpose.msra.mxu0 0.0
        %414 = vmatprep.subr.mxu0 0.0
        %415 = vmatpush1.xpose.msra.mxu0 0.0
        %416 = vmatprep.subr.mxu0 0.0
        %417 = vmatpush1.xpose.msra.mxu0 0.0
        %418 = vmatprep.subr.mxu0 0.0
        %419 = vmatpush1.xpose.msra.mxu0 0.0
        %420 = vmatprep.subr.mxu0 0.0
        %421 = vmatpush1.xpose.msra.mxu0 0.0
        %422 = vmatprep.subr.mxu0 0.0
        %423 = vmatpush1.xpose.msra.mxu0 0.0
        %424 = vmatprep.subr.mxu0 0.0
        %425 = vmatpush1.xpose.msra.mxu0 0.0
        %426 = vmatprep.subr.mxu0 0.0
        %427 = vmatpush1.xpose.msra.mxu0 0.0
        %428 = vmatprep.subr.mxu0 0.0
        %429 = vmatpush1.xpose.msra.mxu0 0.0
        %430 = vmatprep.subr.mxu0 0.0
        %431 = vmatpush1.xpose.msra.mxu0 0.0
        %432 = vmatprep.subr.mxu0 0.0
        %433 = vmatpush1.xpose.msra.mxu0 0.0
        %434 = vmatprep.subr.mxu0 0.0
        %435 = vmatpush1.xpose.msra.mxu0 0.0
        %436 = vmatprep.subr.mxu0 0.0
        %437 = vmatpush1.xpose.msra.mxu0 0.0
        %438 = vmatprep.subr.mxu0 0.0
        %439 = vmatpush1.xpose.msra.mxu0 0.0
        %440 = vmatprep.subr.mxu0 0.0
        %441 = vmatpush1.xpose.msra.mxu0 0.0
        %442 = vmatprep.subr.mxu0 0.0
        %443 = vmatpush1.xpose.msra.mxu0 0.0
        %444 = vmatprep.subr.mxu0 0.0
        %445 = vmatpush1.xpose.msra.mxu0 0.0
        %446 = vmatprep.subr.mxu0 0.0
        %447 = vmatpush1.xpose.msra.mxu0 0.0
        %448 = vmatprep.subr.mxu0 0.0
        %449 = vmatpush1.xpose.msra.mxu0 0.0
        %450 = vmatprep.subr.mxu0 0.0
        %451 = vmatpush1.xpose.msra.mxu0 0.0
        %452 = vmatprep.subr.mxu0 0.0
        %453 = vmatpush1.xpose.msra.mxu0 0.0
        %454 = vmatprep.mubr.f32.mxu0 0.0
        %455 = vmatmul.mubr.f32.gmra.mrb[0].mxu0 %v385
        %v456 = vpop.f32.mrb[0].mxu0
        %v457 = vadd.f32 0.0, %v456
        %v458 = vpop.f32.mrb[0].mxu0
        %459 = vdwg.mxu0
        %v461 = vsel %vm383, %v378, 0
        %v464 = vsel %vm383, %v380, 0
        %466 = vmatprep.subr.mxu0 0.0
        %467 = vmatpush1.xpose.msra.mxu0 %v464
        %468 = vmatprep.subr.mxu0 0.0
        %469 = vmatpush1.xpose.msra.mxu0 0.0
        %470 = vmatprep.subr.mxu0 0.0
        %471 = vmatpush1.xpose.msra.mxu0 0.0
        %472 = vmatprep.subr.mxu0 0.0
        %473 = vmatpush1.xpose.msra.mxu0 0.0
        %474 = vmatprep.subr.mxu0 0.0
        %475 = vmatpush1.xpose.msra.mxu0 0.0
        %476 = vmatprep.subr.mxu0 0.0
        %477 = vmatpush1.xpose.msra.mxu0 0.0
        %478 = vmatprep.subr.mxu0 0.0
        %479 = vmatpush1.xpose.msra.mxu0 0.0
        %480 = vmatprep.subr.mxu0 0.0
        %481 = vmatpush1.xpose.msra.mxu0 0.0
        %482 = vmatprep.subr.mxu0 0.0
        %483 = vmatpush1.xpose.msra.mxu0 0.0
        %484 = vmatprep.subr.mxu0 0.0
        %485 = vmatpush1.xpose.msra.mxu0 0.0
        %486 = vmatprep.subr.mxu0 0.0
        %487 = vmatpush1.xpose.msra.mxu0 0.0
        %488 = vmatprep.subr.mxu0 0.0
        %489 = vmatpush1.xpose.msra.mxu0 0.0
        %490 = vmatprep.subr.mxu0 0.0
        %491 = vmatpush1.xpose.msra.mxu0 0.0
        %492 = vmatprep.subr.mxu0 0.0
        %493 = vmatpush1.xpose.msra.mxu0 0.0
        %494 = vmatprep.subr.mxu0 0.0
        %495 = vmatpush1.xpose.msra.mxu0 0.0
        %496 = vmatprep.subr.mxu0 0.0
        %497 = vmatpush1.xpose.msra.mxu0 0.0
        %498 = vmatprep.subr.mxu0 0.0
        %499 = vmatpush1.xpose.msra.mxu0 0.0
        %500 = vmatprep.subr.mxu0 0.0
        %501 = vmatpush1.xpose.msra.mxu0 0.0
        %502 = vmatprep.subr.mxu0 0.0
        %503 = vmatpush1.xpose.msra.mxu0 0.0
        %504 = vmatprep.subr.mxu0 0.0
        %505 = vmatpush1.xpose.msra.mxu0 0.0
        %506 = vmatprep.subr.mxu0 0.0
        %507 = vmatpush1.xpose.msra.mxu0 0.0
        %508 = vmatprep.subr.mxu0 0.0
        %509 = vmatpush1.xpose.msra.mxu0 0.0
        %510 = vmatprep.subr.mxu0 0.0
        %511 = vmatpush1.xpose.msra.mxu0 0.0
        %512 = vmatprep.subr.mxu0 0.0
        %513 = vmatpush1.xpose.msra.mxu0 0.0
        %514 = vmatprep.subr.mxu0 0.0
        %515 = vmatpush1.xpose.msra.mxu0 0.0
        %516 = vmatprep.subr.mxu0 0.0
        %517 = vmatpush1.xpose.msra.mxu0 0.0
        %518 = vmatprep.subr.mxu0 0.0
        %519 = vmatpush1.xpose.msra.mxu0 0.0
        %520 = vmatprep.subr.mxu0 0.0
        %521 = vmatpush1.xpose.msra.mxu0 0.0
        %522 = vmatprep.subr.mxu0 0.0
        %523 = vmatpush1.xpose.msra.mxu0 0.0
        %524 = vmatprep.subr.mxu0 0.0
        %525 = vmatpush1.xpose.msra.mxu0 0.0
        %526 = vmatprep.subr.mxu0 0.0
        %527 = vmatpush1.xpose.msra.mxu0 0.0
        %528 = vmatprep.subr.mxu0 0.0
        %529 = vmatpush1.xpose.msra.mxu0 0.0
        %530 = vmatprep.mubr.f32.mxu0 0.0
        %531 = vmatmul.mubr.f32.gmra.mrb[0].mxu0 %v461
        %v532 = vpop.f32.mrb[0].mxu0
        %v533 = vadd.f32 0.0, %v532
        %v534 = vpop.f32.mrb[0].mxu0
        %535 = vdwg.mxu0
        %v536 = vld [vmem:[#allocation2] sm:$0xff]
        %v537 = vld [vmem:[#allocation2 + $0x8] sm:$0xff]
        %vm538 = vcmask 64512
        %v539 = vsel %vm538, %v457, -inf
        %540 = vmax.xlane.f32.xlu0 %v539
        %v541 = vpop.xlane.xlu0 %540
        %v542 = vsel %vm538, %v533, -inf
        %543 = vmax.xlane.f32.xlu0 %v542
        %v544 = vpop.xlane.xlu0 %543
        %v545 = vmax.f32 %v536, %v541
        %v546 = vmax.f32 %v537, %v544
        %v547 = vsub.f32 %v536, %v545
        %v548 = vsub.f32 %v537, %v546
        %v549 = vmul.f32 %v547, 1.442695
        %v550 = vpow.pop %v549
        %v551 = vmul.f32 %v548, 1.442695
        %v552 = vpow.pop %v551
        %554 = vset.pattern.permute.xlu0 0
        %555 = vperm.xlu0 %554, %v545
        %v556 = vpop.permute.xlu0 %555
        %559 = vset.pattern.permute.xlu0 0
        %560 = vperm.xlu0 %559, %v546
        %v561 = vpop.permute.xlu0 %560
        %v563 = vsub.f32 %v457, %v556
        %v564 = vsub.f32 %v533, %v561
        %v565 = vmul.f32 %v563, 1.442695
        %v566 = vpow.pop %v565
        %v567 = vmul.f32 %v564, 1.442695
        %v568 = vpow.pop %v567
        %v569 = vld [vmem:[#allocation3] sm:$0xff]
        %v570 = vld [vmem:[#allocation3 + $0x8] sm:$0xff]
        %v571 = vmul.f32 %v550, %v569
        %v572 = vmul.f32 %v552, %v570
        %v573 = vsel %vm538, %v566, 0.0
        %574 = vadd.xlane.f32.xlu0 %v573
        %v575 = vpop.xlane.xlu0 %574
        %v576 = vsel %vm538, %v568, 0.0
        %577 = vadd.xlane.f32.xlu0 %v576
        %v578 = vpop.xlane.xlu0 %577
        %v579 = vadd.f32 %v571, %v575
        %v580 = vadd.f32 %v572, %v578
        %vm581 = vcmask 7168
        %582 = vst.msk [vmem:[#allocation3] sm:$0xff] %vm581, %v579
        %583 = vst.msk [vmem:[#allocation3 + $0x8] sm:$0xff] %vm581, %v580
        %v584 = vld [vmem:[#allocation4] sm:$0xff]
        %v585 = vld [vmem:[#allocation4 + $0x8] sm:$0xff]
        %587 = vset.pattern.permute.xlu0 0
        %588 = vperm.xlu0 %587, %v550
        %v589 = vpop.permute.xlu0 %588
        %592 = vset.pattern.permute.xlu0 0
        %593 = vperm.xlu0 %592, %v552
        %v594 = vpop.permute.xlu0 %593
        %v596 = vmul.f32 %v589, %v584
        %v597 = vmul.f32 %v594, %v585
        %v599 = vsel %vm538, %v566, 0
        %601 = vmatprep.subr.mxu0 0.0
        %602 = vmatpush1.msra.mxu0 %v381
        %603 = vmatprep.subr.mxu0 0.0
        %604 = vmatpush1.msra.mxu0 0.0
        %605 = vmatprep.subr.mxu0 0.0
        %606 = vmatpush1.msra.mxu0 0.0
        %607 = vmatprep.subr.mxu0 0.0
        %608 = vmatpush1.msra.mxu0 0.0
        %609 = vmatprep.subr.mxu0 0.0
        %610 = vmatpush1.msra.mxu0 0.0
        %611 = vmatprep.subr.mxu0 0.0
        %612 = vmatpush1.msra.mxu0 0.0
        %613 = vmatprep.subr.mxu0 0.0
        %614 = vmatpush1.msra.mxu0 0.0
        %615 = vmatprep.subr.mxu0 0.0
        %616 = vmatpush1.msra.mxu0 0.0
        %617 = vmatprep.subr.mxu0 0.0
        %618 = vmatpush1.msra.mxu0 0.0
        %619 = vmatprep.subr.mxu0 0.0
        %620 = vmatpush1.msra.mxu0 0.0
        %621 = vmatprep.subr.mxu0 0.0
        %622 = vmatpush1.msra.mxu0 0.0
        %623 = vmatprep.subr.mxu0 0.0
        %624 = vmatpush1.msra.mxu0 0.0
        %625 = vmatprep.subr.mxu0 0.0
        %626 = vmatpush1.msra.mxu0 0.0
        %627 = vmatprep.subr.mxu0 0.0
        %628 = vmatpush1.msra.mxu0 0.0
        %629 = vmatprep.subr.mxu0 0.0
        %630 = vmatpush1.msra.mxu0 0.0
        %631 = vmatprep.subr.mxu0 0.0
        %632 = vmatpush1.msra.mxu0 0.0
        %633 = vmatprep.subr.mxu0 0.0
        %634 = vmatpush1.msra.mxu0 0.0
        %635 = vmatprep.subr.mxu0 0.0
        %636 = vmatpush1.msra.mxu0 0.0
        %637 = vmatprep.subr.mxu0 0.0
        %638 = vmatpush1.msra.mxu0 0.0
        %639 = vmatprep.subr.mxu0 0.0
        %640 = vmatpush1.msra.mxu0 0.0
        %641 = vmatprep.subr.mxu0 0.0
        %642 = vmatpush1.msra.mxu0 0.0
        %643 = vmatprep.subr.mxu0 0.0
        %644 = vmatpush1.msra.mxu0 0.0
        %645 = vmatprep.subr.mxu0 0.0
        %646 = vmatpush1.msra.mxu0 0.0
        %647 = vmatprep.subr.mxu0 0.0
        %648 = vmatpush1.msra.mxu0 0.0
        %649 = vmatprep.subr.mxu0 0.0
        %650 = vmatpush1.msra.mxu0 0.0
        %651 = vmatprep.subr.mxu0 0.0
        %652 = vmatpush1.msra.mxu0 0.0
        %653 = vmatprep.subr.mxu0 0.0
        %654 = vmatpush1.msra.mxu0 0.0
        %655 = vmatprep.subr.mxu0 0.0
        %656 = vmatpush1.msra.mxu0 0.0
        %657 = vmatprep.subr.mxu0 0.0
        %658 = vmatpush1.msra.mxu0 0.0
        %659 = vmatprep.subr.mxu0 0.0
        %660 = vmatpush1.msra.mxu0 0.0
        %661 = vmatprep.subr.mxu0 0.0
        %662 = vmatpush1.msra.mxu0 0.0
        %663 = vmatprep.subr.mxu0 0.0
        %664 = vmatpush1.msra.mxu0 0.0
        %665 = vmatprep.mubr.f32.mxu0 0.0
        %666 = vmatmul.mubr.f32.gmra.mrb[0].mxu0 %v599
        %v667 = vpop.f32.mrb[0].mxu0
        %v668 = vadd.f32 0.0, %v667
        %v669 = vpop.f32.mrb[0].mxu0
        %670 = vdwg.mxu0
        %v672 = vsel %vm538, %v568, 0
        %674 = vmatprep.subr.mxu0 0.0
        %675 = vmatpush1.msra.mxu0 %v382
        %676 = vmatprep.subr.mxu0 0.0
        %677 = vmatpush1.msra.mxu0 0.0
        %678 = vmatprep.subr.mxu0 0.0
        %679 = vmatpush1.msra.mxu0 0.0
        %680 = vmatprep.subr.mxu0 0.0
        %681 = vmatpush1.msra.mxu0 0.0
        %682 = vmatprep.subr.mxu0 0.0
        %683 = vmatpush1.msra.mxu0 0.0
        %684 = vmatprep.subr.mxu0 0.0
        %685 = vmatpush1.msra.mxu0 0.0
        %686 = vmatprep.subr.mxu0 0.0
        %687 = vmatpush1.msra.mxu0 0.0
        %688 = vmatprep.subr.mxu0 0.0
        %689 = vmatpush1.msra.mxu0 0.0
        %690 = vmatprep.subr.mxu0 0.0
        %691 = vmatpush1.msra.mxu0 0.0
        %692 = vmatprep.subr.mxu0 0.0
        %693 = vmatpush1.msra.mxu0 0.0
        %694 = vmatprep.subr.mxu0 0.0
        %695 = vmatpush1.msra.mxu0 0.0
        %696 = vmatprep.subr.mxu0 0.0
        %697 = vmatpush1.msra.mxu0 0.0
        %698 = vmatprep.subr.mxu0 0.0
        %699 = vmatpush1.msra.mxu0 0.0
        %700 = vmatprep.subr.mxu0 0.0
        %701 = vmatpush1.msra.mxu0 0.0
        %702 = vmatprep.subr.mxu0 0.0
        %703 = vmatpush1.msra.mxu0 0.0
        %704 = vmatprep.subr.mxu0 0.0
        %705 = vmatpush1.msra.mxu0 0.0
        %706 = vmatprep.subr.mxu0 0.0
        %707 = vmatpush1.msra.mxu0 0.0
        %708 = vmatprep.subr.mxu0 0.0
        %709 = vmatpush1.msra.mxu0 0.0
        %710 = vmatprep.subr.mxu0 0.0
        %711 = vmatpush1.msra.mxu0 0.0
        %712 = vmatprep.subr.mxu0 0.0
        %713 = vmatpush1.msra.mxu0 0.0
        %714 = vmatprep.subr.mxu0 0.0
        %715 = vmatpush1.msra.mxu0 0.0
        %716 = vmatprep.subr.mxu0 0.0
        %717 = vmatpush1.msra.mxu0 0.0
        %718 = vmatprep.subr.mxu0 0.0
        %719 = vmatpush1.msra.mxu0 0.0
        %720 = vmatprep.subr.mxu0 0.0
        %721 = vmatpush1.msra.mxu0 0.0
        %722 = vmatprep.subr.mxu0 0.0
        %723 = vmatpush1.msra.mxu0 0.0
        %724 = vmatprep.subr.mxu0 0.0
        %725 = vmatpush1.msra.mxu0 0.0
        %726 = vmatprep.subr.mxu0 0.0
        %727 = vmatpush1.msra.mxu0 0.0
        %728 = vmatprep.subr.mxu0 0.0
        %729 = vmatpush1.msra.mxu0 0.0
        %730 = vmatprep.subr.mxu0 0.0
        %731 = vmatpush1.msra.mxu0 0.0
        %732 = vmatprep.subr.mxu0 0.0
        %733 = vmatpush1.msra.mxu0 0.0
        %734 = vmatprep.subr.mxu0 0.0
        %735 = vmatpush1.msra.mxu0 0.0
        %736 = vmatprep.subr.mxu0 0.0
        %737 = vmatpush1.msra.mxu0 0.0
        %738 = vmatprep.mubr.f32.mxu0 0.0
        %739 = vmatmul.mubr.f32.gmra.mrb[0].mxu0 %v672
        %v740 = vpop.f32.mrb[0].mxu0
        %v741 = vadd.f32 0.0, %v740
        %v742 = vpop.f32.mrb[0].mxu0
        %743 = vdwg.mxu0
        %v744 = vadd.f32 %v596, %v668
        %v745 = vadd.f32 %v597, %v741
        %746 = vst.msk [vmem:[#allocation4] sm:$0xff] %vm383, %v744
        %747 = vst.msk [vmem:[#allocation4 + $0x8] sm:$0xff] %vm383, %v745
        %748 = vst.msk [vmem:[#allocation2] sm:$0xff] %vm581, %v545
        %749 = vst.msk [vmem:[#allocation2 + $0x8] sm:$0xff] %vm581, %v546
        // Predicated region
        $region61: #{tpu_custom_call.1} parent=39 // pred_check
          %p750 = pneg %p365
        $region62: #{tpu_custom_call.1} parent=39 // pred_check_branch
          %752 = sbr.rel (%p750) target = $region64
        $region63: #{tpu_custom_call.1} parent=39 // pred_region
          %v753 = vld [vmem:[#allocation4] sm:$0xff]
          %v754 = vld [vmem:[#allocation4 + $0x8] sm:$0xff]
          %v755 = vld [vmem:[#allocation3] sm:$0xff]
          %v756 = vld [vmem:[#allocation3 + $0x8] sm:$0xff]
          %v757 = vrcp.pop %v755
          %v758 = vrcp.pop %v756
          %760 = vset.pattern.permute.xlu0 0
          %761 = vperm.xlu0 %760, %v757
          %v762 = vpop.permute.xlu0 %761
          %765 = vset.pattern.permute.xlu0 0
          %766 = vperm.xlu0 %765, %v758
          %v767 = vpop.permute.xlu0 %766
          %v769 = vmul.f32 %v753, %v762
          %v770 = vmul.f32 %v754, %v767
          %v771 = vcombine.high %v769, 0.0
          %v773 = vunpack.c.l.s4 1983009808
          %v774 = vunpack.c.0.s8 %v773
          %v775 = vlaneseq
          %v776 = vshrl.u32 %v775, 7
          %v777 = vsub.s32 %v774, %v776
          %v778 = vrot.slane %v769, %v777
          %v780 = vunpack.c.l.s4 1983009808
          %v781 = vunpack.c.0.s8 %v780
          %v782 = vlaneseq
          %v783 = vshrl.u32 %v782, 7
          %v784 = vsub.s32 %v781, %v783
          %v785 = vrot.slane %v771, %v784
          %v786 = vcombine.high %v770, 0.0
          %v788 = vunpack.c.l.s4 1983009808
          %v789 = vunpack.c.0.s8 %v788
          %v790 = vlaneseq
          %v791 = vshrl.u32 %v790, 7
          %v792 = vsub.s32 %v789, %v791
          %v793 = vrot.slane %v770, %v792
          %v795 = vunpack.c.l.s4 1983009808
          %v796 = vunpack.c.0.s8 %v795
          %v797 = vlaneseq
          %v798 = vshrl.u32 %v797, 7
          %v799 = vsub.s32 %v796, %v798
          %v800 = vrot.slane %v786, %v799
          %v801 = vcombine.low %v778, %v793
          %v802 = vcombine.high %v778, %v793
          %v804 = vunpack.c.l.s4 1934713408
          %v805 = vunpack.c.0.s8 %v804
          %v806 = vlaneseq
          %v807 = vshrl.u32 %v806, 7
          %v808 = vsub.s32 %v805, %v807
          %v809 = vrot.slane %v801, %v808
          %v811 = vunpack.c.l.s4 1934713408
          %v812 = vunpack.c.0.s8 %v811
          %v813 = vlaneseq
          %v814 = vshrl.u32 %v813, 7
          %v815 = vsub.s32 %v812, %v814
          %v816 = vrot.slane %v802, %v815
          %v817 = vcombine.low %v785, %v800
          %v818 = vcombine.high %v785, %v800
          %v820 = vunpack.c.l.s4 1934713408
          %v821 = vunpack.c.0.s8 %v820
          %v822 = vlaneseq
          %v823 = vshrl.u32 %v822, 7
          %v824 = vsub.s32 %v821, %v823
          %v825 = vrot.slane %v817, %v824
          %v827 = vunpack.c.l.s4 1934713408
          %v828 = vunpack.c.0.s8 %v827
          %v829 = vlaneseq
          %v830 = vshrl.u32 %v829, 7
          %v831 = vsub.s32 %v828, %v830
          %v832 = vrot.slane %v818, %v831
          %v833 = vcombine.high %v809, 0.0
          %v834 = vcombine.high %v816, 0.0
          %v835 = vcombine.high %v825, 0.0
          %v836 = vcombine.high %v832, 0.0
          %v837 = vcombine.low %v809, %v816
          %v839 = vunpack.c.l.s4 1983009808
          %v840 = vunpack.c.0.s8 %v839
          %v841 = vlaneseq
          %v842 = vshrl.u32 %v841, 7
          %v843 = vsub.s32 %v840, %v842
          %v844 = vrot.slane %v837, %v843
          %v845 = vcombine.low %v833, %v834
          %v847 = vunpack.c.l.s4 1983009808
          %v848 = vunpack.c.0.s8 %v847
          %v849 = vlaneseq
          %v850 = vshrl.u32 %v849, 7
          %v851 = vsub.s32 %v848, %v850
          %v852 = vrot.slane %v845, %v851
          %v853 = vcombine.low %v825, %v832
          %v855 = vunpack.c.l.s4 1983009808
          %v856 = vunpack.c.0.s8 %v855
          %v857 = vlaneseq
          %v858 = vshrl.u32 %v857, 7
          %v859 = vsub.s32 %v856, %v858
          %v860 = vrot.slane %v853, %v859
          %v861 = vcombine.low %v835, %v836
          %v863 = vunpack.c.l.s4 1983009808
          %v864 = vunpack.c.0.s8 %v863
          %v865 = vlaneseq
          %v866 = vshrl.u32 %v865, 7
          %v867 = vsub.s32 %v864, %v866
          %v868 = vrot.slane %v861, %v867
          %v869 = vcombine.low %v844, %v852
          %v871 = vunpack.c.l.s4 1934713408
          %v872 = vunpack.c.0.s8 %v871
          %v873 = vlaneseq
          %v874 = vshrl.u32 %v873, 7
          %v875 = vsub.s32 %v872, %v874
          %v876 = vrot.slane %v869, %v875
          %v877 = vcombine.low %v860, %v868
          %v879 = vunpack.c.l.s4 1934713408
          %v880 = vunpack.c.0.s8 %v879
          %v881 = vlaneseq
          %v882 = vshrl.u32 %v881, 7
          %v883 = vsub.s32 %v880, %v882
          %v884 = vrot.slane %v877, %v883
          %v885 = vcombine.low %v876, %v884
          %v886 = vcombine.high %v876, %v884
          %888 = vrot.lane.b32.xlu0 %v886, 16
          %v889 = vpop.permute.xlu0 %888
          %v891 = vsel %vm383, %v885, %v889
          %v892 = vld [vmem:[#allocation11] sm:$0xff]
          %v893 = vld [vmem:[#allocation11 + $0x8] sm:$0xff]
          %v894 = vld [vmem:[#allocation11 + $0x10] sm:$0xff]
          %v895 = vld [vmem:[#allocation11 + $0x18] sm:$0xff]
          %v896 = vld [vmem:[%s4] sm:$0x1]
          %v898 = vlaneseq
          %v899 = vshrl.u32 %v898, 7
          %v900 = vsub.s32 0, %v899
          %v901 = vrot.slane %v896, %v900
          %vm903 = vcmask 261120
          %v905 = vsel %vm903, %v891, 0
          %907 = vmatprep.subr.mxu0 0.0
          %908 = vmatpush1.msra.mxu0 %v892
          %909 = vmatprep.subr.mxu0 0.0
          %910 = vmatpush1.msra.mxu0 %v893
          %911 = vmatprep.subr.mxu0 0.0
          %912 = vmatpush1.msra.mxu0 %v894
          %913 = vmatprep.subr.mxu0 0.0
          %914 = vmatpush1.msra.mxu0 %v895
          %915 = vmatprep.subr.mxu0 0.0
          %916 = vmatpush1.msra.mxu0 0.0
          %917 = vmatprep.subr.mxu0 0.0
          %918 = vmatpush1.msra.mxu0 0.0
          %919 = vmatprep.subr.mxu0 0.0
          %920 = vmatpush1.msra.mxu0 0.0
          %921 = vmatprep.subr.mxu0 0.0
          %922 = vmatpush1.msra.mxu0 0.0
          %923 = vmatprep.subr.mxu0 0.0
          %924 = vmatpush1.msra.mxu0 0.0
          %925 = vmatprep.subr.mxu0 0.0
          %926 = vmatpush1.msra.mxu0 0.0
          %927 = vmatprep.subr.mxu0 0.0
          %928 = vmatpush1.msra.mxu0 0.0
          %929 = vmatprep.subr.mxu0 0.0
          %930 = vmatpush1.msra.mxu0 0.0
          %931 = vmatprep.subr.mxu0 0.0
          %932 = vmatpush1.msra.mxu0 0.0
          %933 = vmatprep.subr.mxu0 0.0
          %934 = vmatpush1.msra.mxu0 0.0
          %935 = vmatprep.subr.mxu0 0.0
          %936 = vmatpush1.msra.mxu0 0.0
          %937 = vmatprep.subr.mxu0 0.0
          %938 = vmatpush1.msra.mxu0 0.0
          %939 = vmatprep.subr.mxu0 0.0
          %940 = vmatpush1.msra.mxu0 0.0
          %941 = vmatprep.subr.mxu0 0.0
          %942 = vmatpush1.msra.mxu0 0.0
          %943 = vmatprep.subr.mxu0 0.0
          %944 = vmatpush1.msra.mxu0 0.0
          %945 = vmatprep.subr.mxu0 0.0
          %946 = vmatpush1.msra.mxu0 0.0
          %947 = vmatprep.subr.mxu0 0.0
          %948 = vmatpush1.msra.mxu0 0.0
          %949 = vmatprep.subr.mxu0 0.0
          %950 = vmatpush1.msra.mxu0 0.0
          %951 = vmatprep.subr.mxu0 0.0
          %952 = vmatpush1.msra.mxu0 0.0
          %953 = vmatprep.subr.mxu0 0.0
          %954 = vmatpush1.msra.mxu0 0.0
          %955 = vmatprep.subr.mxu0 0.0
          %956 = vmatpush1.msra.mxu0 0.0
          %957 = vmatprep.subr.mxu0 0.0
          %958 = vmatpush1.msra.mxu0 0.0
          %959 = vmatprep.subr.mxu0 0.0
          %960 = vmatpush1.msra.mxu0 0.0
          %961 = vmatprep.subr.mxu0 0.0
          %962 = vmatpush1.msra.mxu0 0.0
          %963 = vmatprep.subr.mxu0 0.0
          %964 = vmatpush1.msra.mxu0 0.0
          %965 = vmatprep.subr.mxu0 0.0
          %966 = vmatpush1.msra.mxu0 0.0
          %967 = vmatprep.subr.mxu0 0.0
          %968 = vmatpush1.msra.mxu0 0.0
          %969 = vmatprep.subr.mxu0 0.0
          %970 = vmatpush1.msra.mxu0 0.0
          %971 = vmatprep.mubr.f32.mxu0 0.0
          %972 = vmatmul.mubr.f32.gmra.mrb[0].mxu0 %v905
          %v973 = vpop.f32.mrb[0].mxu0
          %v974 = vadd.f32 %v901, %v973
          %v975 = vpop.f32.mrb[0].mxu0
          %976 = vdwg.mxu0
          %977 = vst.msk [vmem:[%s364] sm:$0xff] %vm903, %v974
        $region64: #{tpu_custom_call.1} parent=39 // pred_fallthru
          _
        %s978 = sand.u32 %s181, 1
        %s979 = scalar_lea.sflag [#allocation7], %s978
        %s980 = sand.u32 %s181, 1
        %s981 = smul.addr %s980, 8
        %s982 = scalar_lea.vmem [#allocation13], %s981
        // Predicated region
        $region65: #{tpu_custom_call.1} parent=39 // pred_check
          %p983 = pneg %p191
        $region66: #{tpu_custom_call.1} parent=39 // pred_check_branch
          %985 = sbr.rel (%p983) target = $region68
        $region67: #{tpu_custom_call.1} parent=39 // pred_region
          %s987 = ssub.s32 128, 128
          %988 = vsyncadd %s979, %s987
          %s989 = sadd.s32 %s32, %s31
          %s990 = smul.addr %s989, 128
          %s991 = scalar_lea.hbm %s5, %s990
          %s993 = sshll.u32 %s982, 4
          %s994 = int_to_ptr.vmem [resolvable:$true] %s993
          %996 = dma.vmem_to_hbm [thread:$0]  %s994, 128, %s991, %s979
        $region68: #{tpu_custom_call.1} parent=39 // pred_fallthru
          _
      $region40: #{tpu_custom_call.1} parent=5 // pred_fallthru
        _
      %p997 = scmp.le.s32.totalorder 2, %s21
      // Predicated region
      $region69: #{tpu_custom_call.1} parent=5 // pred_check
        %p998 = pneg %p997
      $region70: #{tpu_custom_call.1} parent=5 // pred_check_branch
        %1000 = sbr.rel (%p998) target = $region72
      $region71: #{tpu_custom_call.1} parent=5 // pred_region
        %s1001 = ssub.s32 %s21, 2
        // Predicated region
        $region73: #{tpu_custom_call.1} parent=71 // pred_check
          %p1002 = pneg %p197
        $region74: #{tpu_custom_call.1} parent=71 // pred_check_branch
          %1004 = sbr.rel (%p1002) target = $region76
        $region75: #{tpu_custom_call.1} parent=71 // pred_region
          %s1005 = sand.u32 %s182, 1
          %s1006 = scalar_lea.sflag [#allocation7], %s1005
          %s1007 = sand.u32 %s182, 1
          %s1008 = smul.addr %s1007, 8
          %s1009 = scalar_lea.vmem [#allocation13], %s1008
          %1010 = dma.done %s1006, 128
        $region76: #{tpu_custom_call.1} parent=71 // pred_fallthru
          _
      $region72: #{tpu_custom_call.1} parent=5 // pred_fallthru
        _
    $region6: #{tpu_custom_call.1} parent=1 // loop_footer
      %s25 = sadd.s32 1, %s21
    $region7: #{tpu_custom_call.1} parent=1 // loop_footer_branch
      %20 = sbr.rel target = $region3
    $region8: #{tpu_custom_call.1} parent=1 // loop_exit
      _
    %1011 = vsyncpa [#allocation6], 1
    %s1012 = scalar_lea.sflag [#allocation6], 1
    %1013 = vsyncpa %s1012, 1
    %1014 = vsyncpa [#allocation9], 1
    %s1015 = scalar_lea.sflag [#allocation9], 1
    %1016 = vsyncpa %s1015, 1
    %1017 = vsyncpa [#allocation12], 1
    %1018 = vsyncpa [#allocation7], 1
    %s1019 = scalar_lea.sflag [#allocation7], 1
    %1020 = vsyncpa %s1019, 1

</llo_original>
